<compile_context>
chip_gen: v7x
topology: tpu7x:2x2x1
jax: 0.10.0
libtpu: 0.0.40
codegen_flags: <defaults>
</compile_context>

<pallas_src>
import jax
import jax.numpy as jnp
from jax import lax
from jax.experimental import pallas as pl
from jax.experimental.pallas import tpu as pltpu

EPS = 1e-07


# ----------------------------- tiling helpers ------------------------------ #

def _pick_tile(full, preferred, align):
    """Largest multiple of `align` that is <= preferred and divides `full`;
    falls back to the full dimension (always a legal block size)."""
    t = min(preferred, full)
    t -= t % align
    while t >= align:
        if full % t == 0:
            return t
        t -= align
    return full


# ----------------------------- Pallas kernels ------------------------------ #

def _make_matmul_bias_kernel(compute_dtype):
    def kernel(x_ref, w_ref, b_ref, o_ref, acc_ref):
        # x: (tm, tk), w: (tk, tn), b: (1, tn), o: (tm, tn), acc: (tm, tn) f32
        @pl.when(pl.program_id(2) == 0)
        def _init():
            acc_ref[...] = jnp.zeros_like(acc_ref)

        x = x_ref[...]
        w = w_ref[...]
        if compute_dtype is not None:          # bf16 MXU path (v6e/v7x)
            x = x.astype(compute_dtype)
            w = w.astype(compute_dtype)
        acc_ref[...] += jnp.dot(x, w, preferred_element_type=jnp.float32)

        @pl.when(pl.program_id(2) == pl.num_programs(2) - 1)
        def _finalize():
            # bias added exactly once per output tile, in f32
            o_ref[...] = (acc_ref[...] + b_ref[...].astype(jnp.float32)).astype(o_ref.dtype)

    return kernel


def _make_attn_kernel(num_heads, dim):
    d = dim // num_heads

    def kernel(qkv_ref, o_ref):
        # qkv_ref: (1, L, 3*dim) for one batch; o_ref: (1, L, dim) lane-dense output.
        qkv = qkv_ref[0]                                              # (L, 3*dim)
        q_all = jnp.maximum(qkv[:, 0:dim], 0.0).astype(jnp.float32)   # ReLU(q)
        k_all = jnp.maximum(qkv[:, dim:2 * dim], 0.0).astype(jnp.float32)
        v_all = qkv[:, 2 * dim:3 * dim].astype(jnp.float32)

        head_outs = []
        for h in range(num_heads):                                    # static unroll
            lo, hi = h * d, (h + 1) * d
            q = q_all[:, lo:hi]                                       # (L, d)
            k = k_all[:, lo:hi]                                       # (L, d)
            v = v_all[:, lo:hi]                                       # (L, d)

            l1, d1 = q.shape
            l2, d2 = v.shape
            # Same static cost-based branch as the PyTorch reference (trace-time).
            if l1 * d1 * l2 + l1 * l2 * d2 <= d2 * l2 * d1 + d2 * d1 * l1:
                # (L, L) branch: contract d axes directly (no explicit transpose).
                s = lax.dot_general(q, k, (((1,), (1,)), ((), ())),
                                    preferred_element_type=jnp.float32)        # (L, L)
                s = s * pl.reciprocal(jnp.sum(s, axis=-1, keepdims=True) + EPS)
                out = jnp.dot(s, v, preferred_element_type=jnp.float32)        # (L, d)
            else:
                # (d, d) branch: kv = k^T v via contraction over L (no transpose).
                kv = lax.dot_general(k, v, (((0,), (0,)), ((), ())),
                                     preferred_element_type=jnp.float32)       # (d, d)
                num = jnp.dot(q, kv, preferred_element_type=jnp.float32)       # (L, d)
                ksum = jnp.sum(k, axis=0, keepdims=True)                       # (1, d)
                den = lax.dot_general(q, ksum, (((1,), (1,)), ((), ())),
                                      preferred_element_type=jnp.float32) + EPS  # (L, 1)
                out = num * pl.reciprocal(den)
            head_outs.append(out)

        # Single lane-dense store of all heads: (L, H*d) == (L, dim).
        o_ref[0] = jnp.concatenate(head_outs, axis=-1).astype(o_ref.dtype)

    return kernel


# ------------------------------ Pallas wrappers ----------------------------- #

def linear_pallas(x, w, b, *, tm=256, tn=256, tk=512, compute_dtype=None):
    """y = x @ w + b, tiled + pipelined.  x: (M, K), w: (K, N), b: (N,)."""
    M, K = x.shape
    K2, N = w.shape
    assert K == K2

    # tm is a sublane dim (align 8); tn, tk touch the lane axis (align 128).
    tm = _pick_tile(M, tm, 8)
    tn = _pick_tile(N, tn, 128)
    tk = _pick_tile(K, tk, 128)

    # Tile footprint (f32, 256x256x512): ~2.5 MiB with double-buffering -> fits the
    # default scoped VMEM on v5e/v6e and the smaller 64 MiB v7x without overrides.
    return pl.pallas_call(
        _make_matmul_bias_kernel(compute_dtype),
        out_shape=jax.ShapeDtypeStruct((M, N), x.dtype),
        grid=(M // tm, N // tn, K // tk),
        in_specs=[
            pl.BlockSpec((tm, tk), lambda i, j, k: (i, k)),
            pl.BlockSpec((tk, tn), lambda i, j, k: (k, j)),
            pl.BlockSpec((1, tn), lambda i, j, k: (0, j)),
        ],
        out_specs=pl.BlockSpec((tm, tn), lambda i, j, k: (i, j)),
        scratch_shapes=[pltpu.VMEM((tm, tn), jnp.float32)],
        compiler_params=pltpu.CompilerParams(
            dimension_semantics=("parallel", "parallel", "arbitrary")),
    )(x, w, b.reshape(1, N))


def multihead_linear_attn_pallas(qkv, num_heads, dim):
    """qkv: (B, L, 3*dim) in natural projection layout -> (B, L, dim) attention output."""
    B, L, three_dim = qkv.shape
    assert three_dim == 3 * dim
    # TODO(synk): for very large L (full-L block exceeding VMEM), add an "arbitrary"
    # kv-tile grid axis with kv/ksum accumulation for the q@(k^T v) branch.
    return pl.pallas_call(
        _make_attn_kernel(num_heads, dim),
        out_shape=jax.ShapeDtypeStruct((B, L, dim), qkv.dtype),
        grid=(B,),
        in_specs=[pl.BlockSpec((1, L, 3 * dim), lambda b: (b, 0, 0))],
        out_specs=pl.BlockSpec((1, L, dim), lambda b: (b, 0, 0)),
        compiler_params=pltpu.CompilerParams(dimension_semantics=("parallel",)),
    )(qkv)


# ------------------------------- MultiAttn ---------------------------------- #

def init_multi_attn_params(key, dim):
    """Mirrors nn.Linear default init uniform(-1/sqrt(in), 1/sqrt(in)); stored (in, out)."""
    k1, k2, k3, k4 = jax.random.split(key, 4)
    bound = 1.0 / jnp.sqrt(dim)
    return {
        "w_qkv": jax.random.uniform(k1, (dim, 3 * dim), jnp.float32, -bound, bound),
        "b_qkv": jax.random.uniform(k2, (3 * dim,), jnp.float32, -bound, bound),
        "w_proj": jax.random.uniform(k3, (dim, dim), jnp.float32, -bound, bound),
        "b_proj": jax.random.uniform(k4, (dim,), jnp.float32, -bound, bound),
    }


def multi_attn_forward(x, params, num_heads, *, compute_dtype=None):
    B, L, dim = x.shape

    # qkv projection (tiled Pallas matmul+bias)
    qkv = linear_pallas(x.reshape(B * L, dim), params["w_qkv"], params["b_qkv"],
                        compute_dtype=compute_dtype)
    qkv = qkv.reshape(B, L, 3 * dim)                 # free reshape, no transpose

    # linear attention: all heads per batch, lane-dense (B, L, dim) output,
    # head-split / head-merge handled inside the kernel -> no HBM transposes.
    o = multihead_linear_attn_pallas(qkv, num_heads, dim)

    # output projection (tiled Pallas matmul+bias)
    out = linear_pallas(o.reshape(B * L, dim), params["w_proj"], params["b_proj"],
                        compute_dtype=compute_dtype)
    return out.reshape(B, L, dim)


# --------------------------- pure-JAX reference ------------------------------ #

def _reference_forward(x, params, num_heads):
    B, L, dim = x.shape
    d = dim // num_heads
    qkv = x.reshape(B * L, dim) @ params["w_qkv"] + params["b_qkv"]
    qkv = qkv.reshape(B, L, 3, num_heads, d).transpose(2, 0, 3, 1, 4)
    q, k, v = qkv[0], qkv[1], qkv[2]
    q = jnp.maximum(q, 0.0)
    k = jnp.maximum(k, 0.0)
    l1, d1 = q.shape[-2:]
    l2, d2 = v.shape[-2:]
    kt = jnp.swapaxes(k, -2, -1)
    if l1 * d1 * l2 + l1 * l2 * d2 <= d2 * l2 * d1 + d2 * d1 * l1:
        s = q @ kt
        s = s / (jnp.sum(s, axis=-1, keepdims=True) + EPS)
        o = s @ v
    else:
        o = q @ (kt @ v)
        den = q @ jnp.sum(kt, axis=-1, keepdims=True) + EPS
        o = o / den
    o = jnp.swapaxes(o, 1, 2).reshape(B * L, dim)
    out = o @ params["w_proj"] + params["b_proj"]
    return out.reshape(B, L, dim)


if __name__ == "__main__":
    B, L, dim, num_heads = 2, 8, 32, 4

    key = jax.random.PRNGKey(0)
    k_x, k_p = jax.random.split(key)
    x = jax.random.normal(k_x, (B, L, dim), dtype=jnp.float32)
    params = init_multi_attn_params(k_p, dim)

    out = multi_attn_forward(x, params, num_heads)
    out = jax.block_until_ready(out)

    ref = _reference_forward(x, params, num_heads)
    assert out.shape == (B, L, dim)
    assert jnp.allclose(out, ref, atol=1e-4, rtol=1e-4), "mismatch vs reference"

    print("KERNEL_OK")
</pallas_src>

<mosaic_0001>
module attributes {stable_mosaic.version = 11 : i64} {
  func.func @kernel(%arg0: i32, %arg1: i32, %arg2: i32, %arg3: memref<16x32xf32, #tpu.memory_space<vmem>>, %arg4: memref<32x96xf32, #tpu.memory_space<vmem>>, %arg5: memref<1x96xf32, #tpu.memory_space<vmem>>, %arg6: memref<16x96xf32, #tpu.memory_space<vmem>>, %arg7: memref<16x96xf32, #tpu.memory_space<vmem>>) attributes {dimension_semantics = [#tpu.dimension_semantics<parallel>, #tpu.dimension_semantics<parallel>, #tpu.dimension_semantics<arbitrary>], iteration_bounds = array<i64: 1, 1, 1>, scalar_prefetch = 0 : i64, scratch_operands = 1 : i64, tpu.core_type = #tpu.core_type<tc>, window_params = [{transform_indices = @transform_0, window_bounds = array<i64: 16, 32>}, {transform_indices = @transform_1, window_bounds = array<i64: 32, 96>}, {transform_indices = @transform_2, window_bounds = array<i64: 1, 96>}, {transform_indices = @transform_3, window_bounds = array<i64: 16, 96>}]} {
    %c0_i32 = arith.constant 0 : i32
    %0 = arith.cmpi eq, %arg2, %c0_i32 : i32
    %1 = arith.extui %0 : i1 to i32
    %c0_i32_0 = arith.constant 0 : i32
    %2 = arith.cmpi ne, %1, %c0_i32_0 : i32
    scf.if %2 {
      %cst_10 = arith.constant 0.000000e+00 : f32
      %12 = vector.broadcast %cst_10 : f32 to vector<16x96xf32>
      %c0_11 = arith.constant 0 : index
      %c0_12 = arith.constant 0 : index
      %13 = vector.load %arg7[%c0_11, %c0_12] : memref<16x96xf32, #tpu.memory_space<vmem>>, vector<16x96xf32>
      tpu.vector_store %arg7[%c0_11, %c0_12], %12 {strides = array<i32>} : memref<16x96xf32, #tpu.memory_space<vmem>>, vector<16x96xf32>,
    } else {
    }
    %c0 = arith.constant 0 : index
    %c0_1 = arith.constant 0 : index
    %3 = vector.load %arg3[%c0, %c0_1] : memref<16x32xf32, #tpu.memory_space<vmem>>, vector<16x32xf32>
    %c0_2 = arith.constant 0 : index
    %c0_3 = arith.constant 0 : index
    %4 = vector.load %arg4[%c0_2, %c0_3] : memref<32x96xf32, #tpu.memory_space<vmem>>, vector<32x96xf32>
    %c0_4 = arith.constant 0 : index
    %c0_5 = arith.constant 0 : index
    %5 = vector.load %arg7[%c0_4, %c0_5] : memref<16x96xf32, #tpu.memory_space<vmem>>, vector<16x96xf32>
    %cst = arith.constant dense<0.000000e+00> : vector<16x96xf32>
    %6 = tpu.matmul %3, %4, %cst {dimension_numbers = #tpu.dot_dimension_numbers<[1], [0], [0], [1], [0, 0, 1, 1], [], []>} : vector<16x32xf32>, vector<32x96xf32>, vector<16x96xf32> -> vector<16x96xf32>
    %7 = arith.addf %5, %6 : vector<16x96xf32>
    %c0_6 = arith.constant 0 : index
    %c0_7 = arith.constant 0 : index
    %8 = vector.load %arg7[%c0_6, %c0_7] : memref<16x96xf32, #tpu.memory_space<vmem>>, vector<16x96xf32>
    tpu.vector_store %arg7[%c0_6, %c0_7], %7 {strides = array<i32>} : memref<16x96xf32, #tpu.memory_space<vmem>>, vector<16x96xf32>,
    %c0_i32_8 = arith.constant 0 : i32
    %9 = arith.cmpi eq, %arg2, %c0_i32_8 : i32
    %10 = arith.extui %9 : i1 to i32
    %c0_i32_9 = arith.constant 0 : i32
    %11 = arith.cmpi ne, %10, %c0_i32_9 : i32
    scf.if %11 {
      %c0_10 = arith.constant 0 : index
      %c0_11 = arith.constant 0 : index
      %12 = vector.load %arg7[%c0_10, %c0_11] : memref<16x96xf32, #tpu.memory_space<vmem>>, vector<16x96xf32>
      %c0_12 = arith.constant 0 : index
      %c0_13 = arith.constant 0 : index
      %13 = vector.load %arg5[%c0_12, %c0_13] : memref<1x96xf32, #tpu.memory_space<vmem>>, vector<1x96xf32>
      %14 = vector.broadcast %13 : vector<1x96xf32> to vector<16x96xf32>
      %15 = arith.addf %12, %14 : vector<16x96xf32>
      %c0_14 = arith.constant 0 : index
      %c0_15 = arith.constant 0 : index
      %16 = vector.load %arg6[%c0_14, %c0_15] : memref<16x96xf32, #tpu.memory_space<vmem>>, vector<16x96xf32>
      tpu.vector_store %arg6[%c0_14, %c0_15], %15 {strides = array<i32>} : memref<16x96xf32, #tpu.memory_space<vmem>>, vector<16x96xf32>,
    } else {
    }
    return
  }
  func.func @transform_0(%arg0: i32, %arg1: i32, %arg2: i32) -> (i32, i32) {
    %c0_i32 = arith.constant 0 : i32
    return %arg0, %arg2 : i32, i32
  }
  func.func @transform_1(%arg0: i32, %arg1: i32, %arg2: i32) -> (i32, i32) {
    %c0_i32 = arith.constant 0 : i32
    return %arg2, %arg1 : i32, i32
  }
  func.func @transform_2(%arg0: i32, %arg1: i32, %arg2: i32) -> (i32, i32) {
    %c0_i32 = arith.constant 0 : i32
    %c0_i32_0 = arith.constant 0 : i32
    return %c0_i32, %arg1 : i32, i32
  }
  func.func @transform_3(%arg0: i32, %arg1: i32, %arg2: i32) -> (i32, i32) {
    %c0_i32 = arith.constant 0 : i32
    return %arg0, %arg1 : i32, i32
  }
}

</mosaic_0001>

<llo_original>
// kernel: tpu_custom_call.1
$region0: #{tpu_custom_call.1}
  #allocation0 [shape = 'u32[]', space=smem, size = 0x4, offset = 0x4, fixed_abs, tag = 'smem constant byte address 0x4 - core index']
  #allocation1 [shape = 'u32[144,128]{1,0:T(1,128)}', space=vmem, size = 0x12000, scoped, tag = 'internal scratch']
  #allocation2 [shape = 'f32[16,96]{1,0:T(8,128)}', space=vmem, size = 0x2000, scoped, tag = 'scratch operand']
  %s0 = inlined_call_operand.hbm [shape: f32[16,32], index: 0, kind: input, shape index: {}]
  %s1 = inlined_call_operand.hbm [shape: f32[32,96], index: 1, kind: input, shape index: {}]
  %s2 = inlined_call_operand.vmem [shape: f32[1,96], index: 2, kind: input, shape index: {}]
  %s3 = inlined_call_operand.hbm [shape: f32[16,96], index: 3, kind: output, shape index: {}]
  %s4 = sld [smem:[#allocation0]]
  $region38: #{tpu_custom_call.1} parent=0
    _
  %s6 = ssub.s32 1, %s4
  %s7 = scalar_select 0, %s6, %s4
  $region1: #{tpu_custom_call.1} parent=0
    #allocation3 [shape = 'u8[8192]{0}', space=vmem, size = 0x2000, scoped, tag = 'input window, operand 0, single buffered']
    #allocation4 [shape = 's32[1]{0}', space=sflag, size = 0x4, scoped, tag = 'scoped memory for tpu_custom_call.1']
    #allocation5 [shape = 's32[1]{0}', space=sflag, size = 0x4, scoped, tag = 'scoped memory for tpu_custom_call.1']
    #allocation6 [shape = 'u8[16384]{0}', space=vmem, size = 0x4000, scoped, tag = 'input window, operand 1, single buffered']
    #allocation7 [shape = 's32[1]{0}', space=sflag, size = 0x4, scoped, tag = 'scoped memory for tpu_custom_call.1']
    #allocation8 [shape = 'u8[8192]{0}', space=vmem, size = 0x2000, scoped, tag = 'output window, operand 0, single buffered']
    %8 = vsyncpa [#allocation4], 0
    %9 = vsyncpa [#allocation7], 0
    %10 = vsyncpa [#allocation5], 0
    // Predicated region
    $region2: #{tpu_custom_call.1} parent=1 // pred_check
      _
    $region3: #{tpu_custom_call.1} parent=1 // pred_check_branch
      %12 = sbr.rel (0) target = $region5
    $region4: #{tpu_custom_call.1} parent=1 // pred_region
      %s14 = ssub.s32 256, 256
      %15 = vsyncadd [#allocation4], %s14
      %s16 = sshll.u32 [#allocation3], 4
      %s17 = int_to_ptr.vmem [resolvable:$true] %s16
      %22 = dma.hbm_to_vmem [thread:$0]  %s0, 256, %s17, [#allocation4], 128, 128, 8
    $region5: #{tpu_custom_call.1} parent=1 // pred_fallthru
      _
    // Predicated region
    $region6: #{tpu_custom_call.1} parent=1 // pred_check
      _
    $region7: #{tpu_custom_call.1} parent=1 // pred_check_branch
      %24 = sbr.rel (0) target = $region9
    $region8: #{tpu_custom_call.1} parent=1 // pred_region
      %s26 = ssub.s32 512, 512
      %27 = vsyncadd [#allocation7], %s26
      %s28 = sshll.u32 [#allocation6], 4
      %s29 = int_to_ptr.vmem [resolvable:$true] %s28
      %34 = dma.hbm_to_vmem [thread:$0]  %s1, 512, %s29, [#allocation7], 128, 128, 8
    $region9: #{tpu_custom_call.1} parent=1 // pred_fallthru
      _
    // Predicated region
    $region10: #{tpu_custom_call.1} parent=1 // pred_check
      _
    $region11: #{tpu_custom_call.1} parent=1 // pred_check_branch
      %36 = sbr.rel (0) target = $region13
    $region12: #{tpu_custom_call.1} parent=1 // pred_region
      _
    $region13: #{tpu_custom_call.1} parent=1 // pred_fallthru
      _
    // Predicated region
    $region14: #{tpu_custom_call.1} parent=1 // pred_check
      _
    $region15: #{tpu_custom_call.1} parent=1 // pred_check_branch
      %38 = sbr.rel (0) target = $region17
    $region16: #{tpu_custom_call.1} parent=1 // pred_region
      %39 = dma.done [#allocation4], 256
    $region17: #{tpu_custom_call.1} parent=1 // pred_fallthru
      _
    // Predicated region
    $region18: #{tpu_custom_call.1} parent=1 // pred_check
      _
    $region19: #{tpu_custom_call.1} parent=1 // pred_check_branch
      %41 = sbr.rel (0) target = $region21
    $region20: #{tpu_custom_call.1} parent=1 // pred_region
      %42 = dma.done [#allocation7], 512
    $region21: #{tpu_custom_call.1} parent=1 // pred_fallthru
      _
    %p43 = scmp.eq.s32.totalorder 0, 0
    // Predicated region
    $region22: #{tpu_custom_call.1} parent=1 // pred_check
      %p44 = pneg %p43
    $region23: #{tpu_custom_call.1} parent=1 // pred_check_branch
      %46 = sbr.rel (%p44) target = $region25
    $region24: #{tpu_custom_call.1} parent=1 // pred_region
      %vm47 = vcmask 785408
      %48 = vst.msk [vmem:[#allocation2] sm:$0xff] %vm47, 0.0
      %49 = vst.msk [vmem:[#allocation2 + $0x8] sm:$0xff] %vm47, 0.0
    $region25: #{tpu_custom_call.1} parent=1 // pred_fallthru
      _
    %v50 = vld [vmem:[#allocation3] sm:$0xff]
    %v51 = vld [vmem:[#allocation3 + $0x8] sm:$0xff]
    %v52 = vld [vmem:[#allocation6] sm:$0xff]
    %v53 = vld [vmem:[#allocation6 + $0x8] sm:$0xff]
    %v54 = vld [vmem:[#allocation6 + $0x10] sm:$0xff]
    %v55 = vld [vmem:[#allocation6 + $0x18] sm:$0xff]
    %v56 = vld [vmem:[#allocation2] sm:$0xff]
    %v57 = vld [vmem:[#allocation2 + $0x8] sm:$0xff]
    %vm58 = vcmask 261120
    %v60 = vsel %vm58, %v50, 0
    %v63 = vsel %vm58, %v51, 0
    %65 = vmatprep.subr.mxu0 0.0
    %66 = vmatpush1.msra.mxu0 %v52
    %67 = vmatprep.subr.mxu0 0.0
    %68 = vmatpush1.msra.mxu0 %v53
    %69 = vmatprep.subr.mxu0 0.0
    %70 = vmatpush1.msra.mxu0 %v54
    %71 = vmatprep.subr.mxu0 0.0
    %72 = vmatpush1.msra.mxu0 %v55
    %73 = vmatprep.subr.mxu0 0.0
    %74 = vmatpush1.msra.mxu0 0.0
    %75 = vmatprep.subr.mxu0 0.0
    %76 = vmatpush1.msra.mxu0 0.0
    %77 = vmatprep.subr.mxu0 0.0
    %78 = vmatpush1.msra.mxu0 0.0
    %79 = vmatprep.subr.mxu0 0.0
    %80 = vmatpush1.msra.mxu0 0.0
    %81 = vmatprep.subr.mxu0 0.0
    %82 = vmatpush1.msra.mxu0 0.0
    %83 = vmatprep.subr.mxu0 0.0
    %84 = vmatpush1.msra.mxu0 0.0
    %85 = vmatprep.subr.mxu0 0.0
    %86 = vmatpush1.msra.mxu0 0.0
    %87 = vmatprep.subr.mxu0 0.0
    %88 = vmatpush1.msra.mxu0 0.0
    %89 = vmatprep.subr.mxu0 0.0
    %90 = vmatpush1.msra.mxu0 0.0
    %91 = vmatprep.subr.mxu0 0.0
    %92 = vmatpush1.msra.mxu0 0.0
    %93 = vmatprep.subr.mxu0 0.0
    %94 = vmatpush1.msra.mxu0 0.0
    %95 = vmatprep.subr.mxu0 0.0
    %96 = vmatpush1.msra.mxu0 0.0
    %97 = vmatprep.subr.mxu0 0.0
    %98 = vmatpush1.msra.mxu0 0.0
    %99 = vmatprep.subr.mxu0 0.0
    %100 = vmatpush1.msra.mxu0 0.0
    %101 = vmatprep.subr.mxu0 0.0
    %102 = vmatpush1.msra.mxu0 0.0
    %103 = vmatprep.subr.mxu0 0.0
    %104 = vmatpush1.msra.mxu0 0.0
    %105 = vmatprep.subr.mxu0 0.0
    %106 = vmatpush1.msra.mxu0 0.0
    %107 = vmatprep.subr.mxu0 0.0
    %108 = vmatpush1.msra.mxu0 0.0
    %109 = vmatprep.subr.mxu0 0.0
    %110 = vmatpush1.msra.mxu0 0.0
    %111 = vmatprep.subr.mxu0 0.0
    %112 = vmatpush1.msra.mxu0 0.0
    %113 = vmatprep.subr.mxu0 0.0
    %114 = vmatpush1.msra.mxu0 0.0
    %115 = vmatprep.subr.mxu0 0.0
    %116 = vmatpush1.msra.mxu0 0.0
    %117 = vmatprep.subr.mxu0 0.0
    %118 = vmatpush1.msra.mxu0 0.0
    %119 = vmatprep.subr.mxu0 0.0
    %120 = vmatpush1.msra.mxu0 0.0
    %121 = vmatprep.subr.mxu0 0.0
    %122 = vmatpush1.msra.mxu0 0.0
    %123 = vmatprep.subr.mxu0 0.0
    %124 = vmatpush1.msra.mxu0 0.0
    %125 = vmatprep.subr.mxu0 0.0
    %126 = vmatpush1.msra.mxu0 0.0
    %127 = vmatprep.subr.mxu0 0.0
    %128 = vmatpush1.msra.mxu0 0.0
    %129 = vmatprep.mubr.f32.mxu0 0.0
    %130 = vmatmul.mubr.f32.gmra.mrb[0].mxu0 %v60
    %v131 = vpop.f32.mrb[0].mxu0
    %v132 = vadd.f32 0.0, %v131
    %v133 = vpop.f32.mrb[0].mxu0
    %134 = vmatprep.mubr.f32.mxu0 0.0
    %135 = vmatmul.mubr.f32.gmra.mrb[0].mxu0 %v63
    %v136 = vpop.f32.mrb[0].mxu0
    %v137 = vadd.f32 0.0, %v136
    %v138 = vpop.f32.mrb[0].mxu0
    %139 = vdwg.mxu0
    %v140 = vadd.f32 %v56, %v132
    %v141 = vadd.f32 %v57, %v137
    %vm142 = vcmask 785408
    %143 = vst.msk [vmem:[#allocation2] sm:$0xff] %vm142, %v140
    %144 = vst.msk [vmem:[#allocation2 + $0x8] sm:$0xff] %vm142, %v141
    // Predicated region
    $region26: #{tpu_custom_call.1} parent=1 // pred_check
      %p145 = pneg %p43
    $region27: #{tpu_custom_call.1} parent=1 // pred_check_branch
      %147 = sbr.rel (%p145) target = $region29
    $region28: #{tpu_custom_call.1} parent=1 // pred_region
      %v148 = vld [vmem:[#allocation2] sm:$0xff]
      %v149 = vld [vmem:[#allocation2 + $0x8] sm:$0xff]
      %v150 = vld [vmem:[%s2] sm:$0x1]
      %v152 = vlaneseq
      %v153 = vshrl.u32 %v152, 7
      %v154 = vsub.s32 0, %v153
      %v155 = vrot.slane %v150, %v154
      %v157 = vadd.f32 %v148, %v155
      %v158 = vadd.f32 %v149, %v155
      %159 = vst.msk [vmem:[#allocation8] sm:$0xff] %vm142, %v157
      %160 = vst.msk [vmem:[#allocation8 + $0x8] sm:$0xff] %vm142, %v158
    $region29: #{tpu_custom_call.1} parent=1 // pred_fallthru
      _
    // Predicated region
    $region30: #{tpu_custom_call.1} parent=1 // pred_check
      _
    $region31: #{tpu_custom_call.1} parent=1 // pred_check_branch
      %162 = sbr.rel (0) target = $region33
    $region32: #{tpu_custom_call.1} parent=1 // pred_region
      %s164 = ssub.s32 256, 256
      %165 = vsyncadd [#allocation5], %s164
      %s166 = sshll.u32 [#allocation8], 4
      %s167 = int_to_ptr.vmem [resolvable:$true] %s166
      %172 = dma.vmem_to_hbm [thread:$0]  %s167, 256, %s3, [#allocation5], 128, 128, 8
    $region33: #{tpu_custom_call.1} parent=1 // pred_fallthru
      _
    // Predicated region
    $region34: #{tpu_custom_call.1} parent=1 // pred_check
      _
    $region35: #{tpu_custom_call.1} parent=1 // pred_check_branch
      %174 = sbr.rel (0) target = $region37
    $region36: #{tpu_custom_call.1} parent=1 // pred_region
      %175 = dma.done [#allocation5], 256
    $region37: #{tpu_custom_call.1} parent=1 // pred_fallthru
      _
    %176 = vsyncpa [#allocation4], 1
    %177 = vsyncpa [#allocation7], 1
    %178 = vsyncpa [#allocation5], 1

</llo_original>
